<compile_context>
chip_gen: v5e
topology: v5e:2x2
jax: 0.10.0
libtpu: 0.0.40
codegen_flags: <defaults>
</compile_context>

<pallas_src>
import jax
import jax.numpy as jnp
from jax.experimental import pallas as pl
from jax.experimental.pallas import tpu as pltpu

EPS = 1e-5


def _bn_relu_kernel(x_ref, wb_ref, o_ref):
    # x_ref: (CB, M)   wb_ref: (CB, 2) -- col 0 = weight, col 1 = bias
    x = x_ref[...].astype(jnp.float32)
    m = x.shape[1]
    inv_m = jnp.float32(1.0 / m)

    # One-pass statistics: mean = E[x], var = max(E[x^2] - mean^2, 0)
    s = jnp.sum(x, axis=1, keepdims=True)            # (CB, 1)
    s2 = jnp.sum(x * x, axis=1, keepdims=True)       # (CB, 1)
    mean = s * inv_m
    var = jnp.maximum(s2 * inv_m - mean * mean, 0.0)  # clamp: cancellation guard
    inv_std = jax.lax.rsqrt(var + EPS)                # (CB, 1)

    # Fold affine into a single scale/shift (2 VPU ops/elem in the main pass).
    w = wb_ref[:, 0:1].astype(jnp.float32)
    b = wb_ref[:, 1:2].astype(jnp.float32)
    scale = inv_std * w                               # (CB, 1)
    shift = b - mean * scale                          # (CB, 1)

    y = x * scale + shift
    o_ref[...] = jnp.maximum(y, 0.0).astype(o_ref.dtype)


def _pick_channel_block(c):
    """Largest channel block that divides C, is sublane-aligned, and (if
    possible) gives an even number of blocks (2 TCs on v7x)."""
    candidates = (256, 128, 64, 32, 16, 8)
    for cb in candidates:
        if c % cb == 0 and (c // cb) % 2 == 0:
            return cb
    for cb in candidates:
        if c % cb == 0:
            return cb
    return c  # full-C block (always legal: equals full array dim)


def batchnorm_relu(x_nchw, weight, bias):
    """x_nchw: (N, C, H, W) float32; weight, bias: (C,) float32."""
    N, C, H, W = x_nchw.shape
    M = N * H * W

    # channel-major 2D view: (C, N*H*W)
    x2d = jnp.transpose(x_nchw, (1, 0, 2, 3)).reshape(C, M)
    # pack weight & bias into a single (C, 2) parameter slab (one DMA, not two)
    wb = jnp.stack([weight, bias], axis=1).astype(jnp.float32)

    cb = _pick_channel_block(C)
    grid = (C // cb,)

    cost = pl.CostEstimate(
        flops=8 * C * M,
        transcendentals=C,
        bytes_accessed=(2 * C * M + 2 * C) * 4,
    )

    out2d = pl.pallas_call(
        _bn_relu_kernel,
        out_shape=jax.ShapeDtypeStruct((C, M), x_nchw.dtype),
        grid=grid,
        in_specs=[
            pl.BlockSpec((cb, M), lambda i: (i, 0)),
            pl.BlockSpec((cb, 2), lambda i: (i, 0)),
        ],
        out_specs=pl.BlockSpec((cb, M), lambda i: (i, 0)),
        compiler_params=pltpu.CompilerParams(
            dimension_semantics=("parallel",)),
        cost_estimate=cost,
    )(x2d, wb)

    # back to NCHW
    return jnp.transpose(out2d.reshape(C, N, H, W), (1, 0, 2, 3))


def _reference(x_nchw, weight, bias):
    mean = jnp.mean(x_nchw, axis=(0, 2, 3), keepdims=True)
    var = jnp.mean((x_nchw - mean) ** 2, axis=(0, 2, 3), keepdims=True)
    y = (x_nchw - mean) * jax.lax.rsqrt(var + EPS)
    y = y * weight.reshape(1, -1, 1, 1) + bias.reshape(1, -1, 1, 1)
    return jnp.maximum(y, 0.0)


if __name__ == "__main__":
    key = jax.random.PRNGKey(0)
    kx, kw, kb = jax.random.split(key, 3)

    # shapes implied by the module: BatchNorm2d(768) applied to (1, 768, 14, 14)
    N, C, H, W = 1, 768, 14, 14
    x = jax.random.normal(kx, (N, C, H, W), dtype=jnp.float32)

    # deterministic (non-trivial) affine parameters
    weight = 1.0 + 0.1 * jax.random.normal(kw, (C,), dtype=jnp.float32)
    bias = 0.1 * jax.random.normal(kb, (C,), dtype=jnp.float32)

    out = batchnorm_relu(x, weight, bias)
    jax.block_until_ready(out)

    # sanity: shape preserved, ReLU output non-negative, matches reference
    assert out.shape == (N, C, H, W)
    assert bool(jnp.all(out >= 0.0))
    ref = _reference(x, weight, bias)
    assert bool(jnp.allclose(out, ref, atol=2e-5, rtol=2e-5))

    print("KERNEL_OK")
</pallas_src>

<mosaic_0001>
module attributes {stable_mosaic.version = 11 : i64} {
  func.func @_bn_relu_kernel(%arg0: i32, %arg1: memref<128x196xf32, #tpu.memory_space<vmem>>, %arg2: memref<128x2xf32, #tpu.memory_space<vmem>>, %arg3: memref<128x196xf32, #tpu.memory_space<vmem>>) attributes {dimension_semantics = [#tpu.dimension_semantics<parallel>], iteration_bounds = array<i64: 6>, scalar_prefetch = 0 : i64, scratch_operands = 0 : i64, tpu.core_type = #tpu.core_type<tc>, window_params = [{transform_indices = @transform_0, window_bounds = array<i64: 128, 196>}, {transform_indices = @transform_1, window_bounds = array<i64: 128, 2>}, {transform_indices = @transform_2, window_bounds = array<i64: 128, 196>}]} {
    %c0 = arith.constant 0 : index
    %c0_0 = arith.constant 0 : index
    %0 = vector.load %arg1[%c0, %c0_0] : memref<128x196xf32, #tpu.memory_space<vmem>>, vector<128x196xf32>
    %cst = arith.constant dense<0.000000e+00> : vector<128xf32>
    %1 = vector.multi_reduction <add>, %0, %cst [1] : vector<128x196xf32> to vector<128xf32>
    %2 = vector.shape_cast %1 : vector<128xf32> to vector<128x1xf32>
    %3 = arith.mulf %0, %0 : vector<128x196xf32>
    %cst_1 = arith.constant dense<0.000000e+00> : vector<128xf32>
    %4 = vector.multi_reduction <add>, %3, %cst_1 [1] : vector<128x196xf32> to vector<128xf32>
    %5 = vector.shape_cast %4 : vector<128xf32> to vector<128x1xf32>
    %cst_2 = arith.constant 0.00510204071 : f32
    %6 = vector.broadcast %cst_2 : f32 to vector<128x1xf32>
    %7 = arith.mulf %2, %6 : vector<128x1xf32>
    %cst_3 = arith.constant 0.00510204071 : f32
    %8 = vector.broadcast %cst_3 : f32 to vector<128x1xf32>
    %9 = arith.mulf %5, %8 : vector<128x1xf32>
    %10 = arith.mulf %7, %7 : vector<128x1xf32>
    %11 = arith.subf %9, %10 : vector<128x1xf32>
    %cst_4 = arith.constant 0.000000e+00 : f32
    %12 = vector.broadcast %cst_4 : f32 to vector<128x1xf32>
    %13 = arith.maximumf %11, %12 : vector<128x1xf32>
    %cst_5 = arith.constant 9.99999974E-6 : f32
    %14 = vector.broadcast %cst_5 : f32 to vector<128x1xf32>
    %15 = arith.addf %13, %14 : vector<128x1xf32>
    %16 = math.rsqrt %15 : vector<128x1xf32>
    %c0_6 = arith.constant 0 : index
    %c0_7 = arith.constant 0 : index
    %17 = vector.load %arg2[%c0_6, %c0_7] : memref<128x2xf32, #tpu.memory_space<vmem>>, vector<128x1xf32>
    %c0_8 = arith.constant 0 : index
    %c1 = arith.constant 1 : index
    %18 = vector.load %arg2[%c0_8, %c1] : memref<128x2xf32, #tpu.memory_space<vmem>>, vector<128x1xf32>
    %19 = arith.mulf %16, %17 : vector<128x1xf32>
    %20 = arith.mulf %7, %19 : vector<128x1xf32>
    %21 = arith.subf %18, %20 : vector<128x1xf32>
    %22 = vector.broadcast %19 : vector<128x1xf32> to vector<128x196xf32>
    %23 = arith.mulf %0, %22 : vector<128x196xf32>
    %24 = vector.broadcast %21 : vector<128x1xf32> to vector<128x196xf32>
    %25 = arith.addf %23, %24 : vector<128x196xf32>
    %cst_9 = arith.constant 0.000000e+00 : f32
    %26 = vector.broadcast %cst_9 : f32 to vector<128x196xf32>
    %27 = arith.maximumf %25, %26 : vector<128x196xf32>
    %c0_10 = arith.constant 0 : index
    %c0_11 = arith.constant 0 : index
    %28 = vector.load %arg3[%c0_10, %c0_11] : memref<128x196xf32, #tpu.memory_space<vmem>>, vector<128x196xf32>
    tpu.vector_store %arg3[%c0_10, %c0_11], %27 {strides = array<i32>} : memref<128x196xf32, #tpu.memory_space<vmem>>, vector<128x196xf32>,
    return
  }
  func.func @transform_0(%arg0: i32) -> (i32, i32) {
    %c0_i32 = arith.constant 0 : i32
    %c0_i32_0 = arith.constant 0 : i32
    return %arg0, %c0_i32 : i32, i32
  }
  func.func @transform_1(%arg0: i32) -> (i32, i32) {
    %c0_i32 = arith.constant 0 : i32
    %c0_i32_0 = arith.constant 0 : i32
    return %arg0, %c0_i32 : i32, i32
  }
  func.func @transform_2(%arg0: i32) -> (i32, i32) {
    %c0_i32 = arith.constant 0 : i32
    %c0_i32_0 = arith.constant 0 : i32
    return %arg0, %c0_i32 : i32, i32
  }
}

</mosaic_0001>

<llo_original>
// kernel: tpu_custom_call.1
$region0: #{tpu_custom_call.1}
  #allocation0 [shape = 'u32[]', space=smem, size = 0x4, offset = 0x4, fixed_abs, tag = 'smem constant byte address 0x4 - core index']
  #allocation1 [shape = 'u32[72,128]{1,0:T(1,128)}', space=vmem, size = 0x9000, scoped, tag = 'internal scratch']
  %s0 = inlined_call_operand.vmem [shape: f32[768,196], index: 0, kind: input, shape index: {}]
  %s1 = inlined_call_operand.vmem [shape: f32[768,2], index: 1, kind: input, shape index: {}]
  %s2 = inlined_call_operand.vmem [shape: f32[768,196], index: 2, kind: output, shape index: {}]
  %s3 = sld [smem:[#allocation0]]
  $region41: #{tpu_custom_call.1} parent=0
    _
  %s5 = ssub.s32 1, %s3
  %s6 = scalar_select 0, %s5, %s3
  loop: start=0, step=1, limit=8
  $region2: #{tpu_custom_call.1} parent=0 // loop_pre_header
    _
  $region3: #{tpu_custom_call.1} parent=0 // loop_header
    %s8 = sphi 0, %s12
    %p9 = scmp.ge.s32.totalorder %s8, 8
    %s18 = sphi 0, %s20
    %s21 = sphi 0, %s18
    %s22 = sphi 0, %s21
    %s38 = sphi 0, %s22
    %s44 = sphi 0, %s46
    %s47 = sphi 0, %s44
    %s48 = sphi 0, %s47
    %s64 = sphi 0, %s48
    %s70 = sphi 0, %s72
    %s73 = sphi 0, %s70
    %s74 = sphi 0, %s73
    %s90 = sphi 0, %s74
  $region4: #{tpu_custom_call.1} parent=0 // loop_header_branch
    %11 = sbr.rel (%p9) target = $region8
  $region5: #{tpu_custom_call.1} parent=0 // loop_body
    %s13 = ssub.s32 %s8, 1
    %s14 = ssub.s32 %s8, 2
    %s15 = sadd.s32 %s8, 1
    %s16 = ssub.s32 %s8, %s15
    %p17 = scmp.eq.s32.totalorder %s16, 0
    %s19 = sadd.s32 %s18, 1
    %s20 = scalar_select %p17, %s18, %s19
    %p23 = pneg %p17
    %p24 = scmp.eq.s32.totalorder %s8, 5
    %p25 = por %p23, %p24
    %p26 = scmp.ne.s32.totalorder %s18, %s21
    %p27 = scmp.eq.s32.totalorder %s8, 0
    %p28 = por %p26, %p27
    %p29 = scmp.ne.s32.totalorder %s18, %s21
    %p30 = scmp.eq.s32.totalorder %s13, 5
    %p31 = por %p29, %p30
    %p32 = scmp.ne.s32.totalorder %s21, %s22
    %p33 = scmp.eq.s32.totalorder %s13, 0
    %p34 = por %p32, %p33
    %p35 = scmp.ne.s32.totalorder %s21, %s22
    %p36 = scmp.eq.s32.totalorder %s14, 5
    %p37 = por %p35, %p36
    %p39 = scmp.ne.s32.totalorder %s22, %s38
    %p40 = scmp.eq.s32.totalorder %s14, 0
    %p41 = por %p39, %p40
    %s42 = ssub.s32 %s8, %s15
    %p43 = scmp.eq.s32.totalorder %s42, 0
    %s45 = sadd.s32 %s44, 1
    %s46 = scalar_select %p43, %s44, %s45
    %p49 = pneg %p43
    %p50 = scmp.eq.s32.totalorder %s8, 5
    %p51 = por %p49, %p50
    %p52 = scmp.ne.s32.totalorder %s44, %s47
    %p53 = scmp.eq.s32.totalorder %s8, 0
    %p54 = por %p52, %p53
    %p55 = scmp.ne.s32.totalorder %s44, %s47
    %p56 = scmp.eq.s32.totalorder %s13, 5
    %p57 = por %p55, %p56
    %p58 = scmp.ne.s32.totalorder %s47, %s48
    %p59 = scmp.eq.s32.totalorder %s13, 0
    %p60 = por %p58, %p59
    %p61 = scmp.ne.s32.totalorder %s47, %s48
    %p62 = scmp.eq.s32.totalorder %s14, 5
    %p63 = por %p61, %p62
    %p65 = scmp.ne.s32.totalorder %s48, %s64
    %p66 = scmp.eq.s32.totalorder %s14, 0
    %p67 = por %p65, %p66
    %s68 = ssub.s32 %s8, %s15
    %p69 = scmp.eq.s32.totalorder %s68, 0
    %s71 = sadd.s32 %s70, 1
    %s72 = scalar_select %p69, %s70, %s71
    %p75 = pneg %p69
    %p76 = scmp.eq.s32.totalorder %s8, 5
    %p77 = por %p75, %p76
    %p78 = scmp.ne.s32.totalorder %s70, %s73
    %p79 = scmp.eq.s32.totalorder %s8, 0
    %p80 = por %p78, %p79
    %p81 = scmp.ne.s32.totalorder %s70, %s73
    %p82 = scmp.eq.s32.totalorder %s13, 5
    %p83 = por %p81, %p82
    %p84 = scmp.ne.s32.totalorder %s73, %s74
    %p85 = scmp.eq.s32.totalorder %s13, 0
    %p86 = por %p84, %p85
    %p87 = scmp.ne.s32.totalorder %s73, %s74
    %p88 = scmp.eq.s32.totalorder %s14, 5
    %p89 = por %p87, %p88
    %p91 = scmp.ne.s32.totalorder %s74, %s90
    %p92 = scmp.eq.s32.totalorder %s14, 0
    %p93 = por %p91, %p92
    %p94 = scmp.le.s32.totalorder 1, %s8
    %p95 = scmp.lt.s32.totalorder %s8, 7
    %p96 = pnand %p94, %p95
    %p97 = pneg %p96
    // Predicated region
    $region9: #{tpu_custom_call.1} parent=5 // pred_check
      _
    $region10: #{tpu_custom_call.1} parent=5 // pred_check_branch
      %99 = sbr.rel (%p96) target = $region12
    $region11: #{tpu_custom_call.1} parent=5 // pred_region
      %s100 = ssub.s32 %s8, 1
    $region12: #{tpu_custom_call.1} parent=5 // pred_fallthru
      _
    %p101 = scmp.lt.s32.totalorder %s8, 6
    // Predicated region
    $region13: #{tpu_custom_call.1} parent=5 // pred_check
      %p102 = pneg %p101
    $region14: #{tpu_custom_call.1} parent=5 // pred_check_branch
      %104 = sbr.rel (%p102) target = $region16
    $region15: #{tpu_custom_call.1} parent=5 // pred_region
      // Predicated region
      $region17: #{tpu_custom_call.1} parent=15 // pred_check
        %p105 = pneg %p28
      $region18: #{tpu_custom_call.1} parent=15 // pred_check_branch
        %107 = sbr.rel (%p105) target = $region20
      $region19: #{tpu_custom_call.1} parent=15 // pred_region
        %s108 = smul.u32 16, %s8
        %p109 = scmp.lt.s32.totalorder %s108, 95
        %s110 = scalar_select %p109, %s108, 95
        %s111 = smul.addr %s110, 2
        %s112 = smul.addr %s111, 8
        %s113 = scalar_lea.vmem %s0, %s112
        %s114 = smul.u32 16, %s8
      $region20: #{tpu_custom_call.1} parent=15 // pred_fallthru
        _
      // Predicated region
      $region21: #{tpu_custom_call.1} parent=15 // pred_check
        %p115 = pneg %p54
      $region22: #{tpu_custom_call.1} parent=15 // pred_check_branch
        %117 = sbr.rel (%p115) target = $region24
      $region23: #{tpu_custom_call.1} parent=15 // pred_region
        %s118 = smul.u32 16, %s8
        %p119 = scmp.lt.s32.totalorder %s118, 95
        %s120 = scalar_select %p119, %s118, 95
        %s121 = smul.addr %s120, 8
        %s122 = scalar_lea.vmem %s1, %s121
        %s123 = smul.u32 16, %s8
      $region24: #{tpu_custom_call.1} parent=15 // pred_fallthru
        _
    $region16: #{tpu_custom_call.1} parent=5 // pred_fallthru
      _
    %p124 = scmp.le.s32.totalorder 1, %s8
    %p125 = scmp.lt.s32.totalorder %s8, 7
    %p126 = pnand %p124, %p125
    %p127 = pneg %p126
    // Predicated region
    $region25: #{tpu_custom_call.1} parent=5 // pred_check
      _
    $region26: #{tpu_custom_call.1} parent=5 // pred_check_branch
      %129 = sbr.rel (%p126) target = $region28
    $region27: #{tpu_custom_call.1} parent=5 // pred_region
      %s130 = ssub.s32 %s8, 1
      %s131 = smul.u32 16, %s13
      %p132 = scmp.lt.s32.totalorder %s131, 95
      %s133 = scalar_select %p132, %s131, 95
      %s134 = smul.addr %s133, 2
      %s135 = smul.addr %s134, 8
      %s136 = scalar_lea.vmem %s0, %s135
      %p137 = pneg %p34
      %p138 = pneg %p31
      %s139 = smul.u32 16, %s13
      %p140 = scmp.lt.s32.totalorder %s139, 95
      %s141 = scalar_select %p140, %s139, 95
      %s142 = smul.addr %s141, 8
      %s143 = scalar_lea.vmem %s1, %s142
      %p144 = pneg %p60
      %p145 = pneg %p57
      %p146 = pneg %p86
      %p147 = pneg %p83
      %s148 = smul.u32 16, %s13
      %p149 = scmp.lt.s32.totalorder %s148, 95
      %s150 = scalar_select %p149, %s148, 95
      %s151 = smul.addr %s150, 2
      %s152 = smul.addr %s151, 8
      %s153 = scalar_lea.vmem %s2, %s152
      %s154 = smul.u32 16, %s13
      %p155 = scmp.lt.s32.totalorder %s154, 95
      %s156 = scalar_select %p155, %s154, 95
      %s157 = smul.addr %s156, 2
      %s158 = smul.addr %s157, 8
      %s159 = scalar_lea.vmem %s0, %s158
      %s160 = smul.u32 16, %s13
      %s161 = smul.u32 16, %s13
      %p162 = scmp.lt.s32.totalorder %s161, 95
      %s163 = scalar_select %p162, %s161, 95
      %s164 = smul.addr %s163, 8
      %s165 = scalar_lea.vmem %s1, %s164
      %s166 = smul.u32 16, %s13
      %s167 = smul.u32 16, %s13
      %p168 = scmp.lt.s32.totalorder %s167, 95
      %s169 = scalar_select %p168, %s167, 95
      %s170 = smul.addr %s169, 2
      %s171 = smul.addr %s170, 8
      %s172 = scalar_lea.vmem %s2, %s171
      %s173 = smul.u32 16, %s13
      %v174 = vld [vmem:[%s159] sm:$0xff]
      %v175 = vld [vmem:[%s159 + $0x8] sm:$0xff]
      %v176 = vld [vmem:[%s159 + $0x10] sm:$0xff]
      %v177 = vld [vmem:[%s159 + $0x18] sm:$0xff]
      %v178 = vld [vmem:[%s159 + $0x20] sm:$0xff]
      %v179 = vld [vmem:[%s159 + $0x28] sm:$0xff]
      %v180 = vld [vmem:[%s159 + $0x30] sm:$0xff]
      %v181 = vld [vmem:[%s159 + $0x38] sm:$0xff]
      %v182 = vld [vmem:[%s159 + $0x40] sm:$0xff]
      %v183 = vld [vmem:[%s159 + $0x48] sm:$0xff]
      %v184 = vld [vmem:[%s159 + $0x50] sm:$0xff]
      %v185 = vld [vmem:[%s159 + $0x58] sm:$0xff]
      %v186 = vld [vmem:[%s159 + $0x60] sm:$0xff]
      %v187 = vld [vmem:[%s159 + $0x68] sm:$0xff]
      %v188 = vld [vmem:[%s159 + $0x70] sm:$0xff]
      %v189 = vld [vmem:[%s159 + $0x78] sm:$0xff]
      %v190 = vld [vmem:[%s159 + $0x80] sm:$0xff]
      %v191 = vld [vmem:[%s159 + $0x88] sm:$0xff]
      %v192 = vld [vmem:[%s159 + $0x90] sm:$0xff]
      %v193 = vld [vmem:[%s159 + $0x98] sm:$0xff]
      %v194 = vld [vmem:[%s159 + $0xa0] sm:$0xff]
      %v195 = vld [vmem:[%s159 + $0xa8] sm:$0xff]
      %v196 = vld [vmem:[%s159 + $0xb0] sm:$0xff]
      %v197 = vld [vmem:[%s159 + $0xb8] sm:$0xff]
      %v198 = vld [vmem:[%s159 + $0xc0] sm:$0xff]
      %v199 = vld [vmem:[%s159 + $0xc8] sm:$0xff]
      %v200 = vld [vmem:[%s159 + $0xd0] sm:$0xff]
      %v201 = vld [vmem:[%s159 + $0xd8] sm:$0xff]
      %v202 = vld [vmem:[%s159 + $0xe0] sm:$0xff]
      %v203 = vld [vmem:[%s159 + $0xe8] sm:$0xff]
      %v204 = vld [vmem:[%s159 + $0xf0] sm:$0xff]
      %v205 = vld [vmem:[%s159 + $0xf8] sm:$0xff]
      %vm206 = vcmask 556032
      %v207 = vsel %vm206, %v175, 0.0
      %v208 = vadd.f32 %v174, %v207
      %209 = vadd.xlane.f32.xlu0 %v208
      %v210 = vpop.xlane.xlu0 %209
      %v211 = vsel %vm206, %v177, 0.0
      %v212 = vadd.f32 %v176, %v211
      %213 = vadd.xlane.f32.xlu0 %v212
      %v214 = vpop.xlane.xlu0 %213
      %v215 = vsel %vm206, %v179, 0.0
      %v216 = vadd.f32 %v178, %v215
      %217 = vadd.xlane.f32.xlu0 %v216
      %v218 = vpop.xlane.xlu0 %217
      %v219 = vsel %vm206, %v181, 0.0
      %v220 = vadd.f32 %v180, %v219
      %221 = vadd.xlane.f32.xlu0 %v220
      %v222 = vpop.xlane.xlu0 %221
      %v223 = vsel %vm206, %v183, 0.0
      %v224 = vadd.f32 %v182, %v223
      %225 = vadd.xlane.f32.xlu0 %v224
      %v226 = vpop.xlane.xlu0 %225
      %v227 = vsel %vm206, %v185, 0.0
      %v228 = vadd.f32 %v184, %v227
      %229 = vadd.xlane.f32.xlu0 %v228
      %v230 = vpop.xlane.xlu0 %229
      %v231 = vsel %vm206, %v187, 0.0
      %v232 = vadd.f32 %v186, %v231
      %233 = vadd.xlane.f32.xlu0 %v232
      %v234 = vpop.xlane.xlu0 %233
      %v235 = vsel %vm206, %v189, 0.0
      %v236 = vadd.f32 %v188, %v235
      %237 = vadd.xlane.f32.xlu0 %v236
      %v238 = vpop.xlane.xlu0 %237
      %v239 = vsel %vm206, %v191, 0.0
      %v240 = vadd.f32 %v190, %v239
      %241 = vadd.xlane.f32.xlu0 %v240
      %v242 = vpop.xlane.xlu0 %241
      %v243 = vsel %vm206, %v193, 0.0
      %v244 = vadd.f32 %v192, %v243
      %245 = vadd.xlane.f32.xlu0 %v244
      %v246 = vpop.xlane.xlu0 %245
      %v247 = vsel %vm206, %v195, 0.0
      %v248 = vadd.f32 %v194, %v247
      %249 = vadd.xlane.f32.xlu0 %v248
      %v250 = vpop.xlane.xlu0 %249
      %v251 = vsel %vm206, %v197, 0.0
      %v252 = vadd.f32 %v196, %v251
      %253 = vadd.xlane.f32.xlu0 %v252
      %v254 = vpop.xlane.xlu0 %253
      %v255 = vsel %vm206, %v199, 0.0
      %v256 = vadd.f32 %v198, %v255
      %257 = vadd.xlane.f32.xlu0 %v256
      %v258 = vpop.xlane.xlu0 %257
      %v259 = vsel %vm206, %v201, 0.0
      %v260 = vadd.f32 %v200, %v259
      %261 = vadd.xlane.f32.xlu0 %v260
      %v262 = vpop.xlane.xlu0 %261
      %v263 = vsel %vm206, %v203, 0.0
      %v264 = vadd.f32 %v202, %v263
      %265 = vadd.xlane.f32.xlu0 %v264
      %v266 = vpop.xlane.xlu0 %265
      %v267 = vsel %vm206, %v205, 0.0
      %v268 = vadd.f32 %v204, %v267
      %269 = vadd.xlane.f32.xlu0 %v268
      %v270 = vpop.xlane.xlu0 %269
      %v271 = vmul.f32 %v174, %v174
      %v272 = vmul.f32 %v175, %v175
      %v273 = vmul.f32 %v176, %v176
      %v274 = vmul.f32 %v177, %v177
      %v275 = vmul.f32 %v178, %v178
      %v276 = vmul.f32 %v179, %v179
      %v277 = vmul.f32 %v180, %v180
      %v278 = vmul.f32 %v181, %v181
      %v279 = vmul.f32 %v182, %v182
      %v280 = vmul.f32 %v183, %v183
      %v281 = vmul.f32 %v184, %v184
      %v282 = vmul.f32 %v185, %v185
      %v283 = vmul.f32 %v186, %v186
      %v284 = vmul.f32 %v187, %v187
      %v285 = vmul.f32 %v188, %v188
      %v286 = vmul.f32 %v189, %v189
      %v287 = vmul.f32 %v190, %v190
      %v288 = vmul.f32 %v191, %v191
      %v289 = vmul.f32 %v192, %v192
      %v290 = vmul.f32 %v193, %v193
      %v291 = vmul.f32 %v194, %v194
      %v292 = vmul.f32 %v195, %v195
      %v293 = vmul.f32 %v196, %v196
      %v294 = vmul.f32 %v197, %v197
      %v295 = vmul.f32 %v198, %v198
      %v296 = vmul.f32 %v199, %v199
      %v297 = vmul.f32 %v200, %v200
      %v298 = vmul.f32 %v201, %v201
      %v299 = vmul.f32 %v202, %v202
      %v300 = vmul.f32 %v203, %v203
      %v301 = vmul.f32 %v204, %v204
      %v302 = vmul.f32 %v205, %v205
      %v303 = vsel %vm206, %v272, 0.0
      %v304 = vadd.f32 %v271, %v303
      %305 = vadd.xlane.f32.xlu0 %v304
      %v306 = vpop.xlane.xlu0 %305
      %v307 = vsel %vm206, %v274, 0.0
      %v308 = vadd.f32 %v273, %v307
      %309 = vadd.xlane.f32.xlu0 %v308
      %v310 = vpop.xlane.xlu0 %309
      %v311 = vsel %vm206, %v276, 0.0
      %v312 = vadd.f32 %v275, %v311
      %313 = vadd.xlane.f32.xlu0 %v312
      %v314 = vpop.xlane.xlu0 %313
      %v315 = vsel %vm206, %v278, 0.0
      %v316 = vadd.f32 %v277, %v315
      %317 = vadd.xlane.f32.xlu0 %v316
      %v318 = vpop.xlane.xlu0 %317
      %v319 = vsel %vm206, %v280, 0.0
      %v320 = vadd.f32 %v279, %v319
      %321 = vadd.xlane.f32.xlu0 %v320
      %v322 = vpop.xlane.xlu0 %321
      %v323 = vsel %vm206, %v282, 0.0
      %v324 = vadd.f32 %v281, %v323
      %325 = vadd.xlane.f32.xlu0 %v324
      %v326 = vpop.xlane.xlu0 %325
      %v327 = vsel %vm206, %v284, 0.0
      %v328 = vadd.f32 %v283, %v327
      %329 = vadd.xlane.f32.xlu0 %v328
      %v330 = vpop.xlane.xlu0 %329
      %v331 = vsel %vm206, %v286, 0.0
      %v332 = vadd.f32 %v285, %v331
      %333 = vadd.xlane.f32.xlu0 %v332
      %v334 = vpop.xlane.xlu0 %333
      %v335 = vsel %vm206, %v288, 0.0
      %v336 = vadd.f32 %v287, %v335
      %337 = vadd.xlane.f32.xlu0 %v336
      %v338 = vpop.xlane.xlu0 %337
      %v339 = vsel %vm206, %v290, 0.0
      %v340 = vadd.f32 %v289, %v339
      %341 = vadd.xlane.f32.xlu0 %v340
      %v342 = vpop.xlane.xlu0 %341
      %v343 = vsel %vm206, %v292, 0.0
      %v344 = vadd.f32 %v291, %v343
      %345 = vadd.xlane.f32.xlu0 %v344
      %v346 = vpop.xlane.xlu0 %345
      %v347 = vsel %vm206, %v294, 0.0
      %v348 = vadd.f32 %v293, %v347
      %349 = vadd.xlane.f32.xlu0 %v348
      %v350 = vpop.xlane.xlu0 %349
      %v351 = vsel %vm206, %v296, 0.0
      %v352 = vadd.f32 %v295, %v351
      %353 = vadd.xlane.f32.xlu0 %v352
      %v354 = vpop.xlane.xlu0 %353
      %v355 = vsel %vm206, %v298, 0.0
      %v356 = vadd.f32 %v297, %v355
      %357 = vadd.xlane.f32.xlu0 %v356
      %v358 = vpop.xlane.xlu0 %357
      %v359 = vsel %vm206, %v300, 0.0
      %v360 = vadd.f32 %v299, %v359
      %361 = vadd.xlane.f32.xlu0 %v360
      %v362 = vpop.xlane.xlu0 %361
      %v363 = vsel %vm206, %v302, 0.0
      %v364 = vadd.f32 %v301, %v363
      %365 = vadd.xlane.f32.xlu0 %v364
      %v366 = vpop.xlane.xlu0 %365
      %v367 = vmul.f32 %v210, 0.0051020407
      %v368 = vmul.f32 %v214, 0.0051020407
      %v369 = vmul.f32 %v218, 0.0051020407
      %v370 = vmul.f32 %v222, 0.0051020407
      %v371 = vmul.f32 %v226, 0.0051020407
      %v372 = vmul.f32 %v230, 0.0051020407
      %v373 = vmul.f32 %v234, 0.0051020407
      %v374 = vmul.f32 %v238, 0.0051020407
      %v375 = vmul.f32 %v242, 0.0051020407
      %v376 = vmul.f32 %v246, 0.0051020407
      %v377 = vmul.f32 %v250, 0.0051020407
      %v378 = vmul.f32 %v254, 0.0051020407
      %v379 = vmul.f32 %v258, 0.0051020407
      %v380 = vmul.f32 %v262, 0.0051020407
      %v381 = vmul.f32 %v266, 0.0051020407
      %v382 = vmul.f32 %v270, 0.0051020407
      %v383 = vmul.f32 %v306, 0.0051020407
      %v384 = vmul.f32 %v310, 0.0051020407
      %v385 = vmul.f32 %v314, 0.0051020407
      %v386 = vmul.f32 %v318, 0.0051020407
      %v387 = vmul.f32 %v322, 0.0051020407
      %v388 = vmul.f32 %v326, 0.0051020407
      %v389 = vmul.f32 %v330, 0.0051020407
      %v390 = vmul.f32 %v334, 0.0051020407
      %v391 = vmul.f32 %v338, 0.0051020407
      %v392 = vmul.f32 %v342, 0.0051020407
      %v393 = vmul.f32 %v346, 0.0051020407
      %v394 = vmul.f32 %v350, 0.0051020407
      %v395 = vmul.f32 %v354, 0.0051020407
      %v396 = vmul.f32 %v358, 0.0051020407
      %v397 = vmul.f32 %v362, 0.0051020407
      %v398 = vmul.f32 %v366, 0.0051020407
      %v399 = vmul.f32 %v367, %v367
      %v400 = vmul.f32 %v368, %v368
      %v401 = vmul.f32 %v369, %v369
      %v402 = vmul.f32 %v370, %v370
      %v403 = vmul.f32 %v371, %v371
      %v404 = vmul.f32 %v372, %v372
      %v405 = vmul.f32 %v373, %v373
      %v406 = vmul.f32 %v374, %v374
      %v407 = vmul.f32 %v375, %v375
      %v408 = vmul.f32 %v376, %v376
      %v409 = vmul.f32 %v377, %v377
      %v410 = vmul.f32 %v378, %v378
      %v411 = vmul.f32 %v379, %v379
      %v412 = vmul.f32 %v380, %v380
      %v413 = vmul.f32 %v381, %v381
      %v414 = vmul.f32 %v382, %v382
      %v415 = vsub.f32 %v383, %v399
      %v416 = vsub.f32 %v384, %v400
      %v417 = vsub.f32 %v385, %v401
      %v418 = vsub.f32 %v386, %v402
      %v419 = vsub.f32 %v387, %v403
      %v420 = vsub.f32 %v388, %v404
      %v421 = vsub.f32 %v389, %v405
      %v422 = vsub.f32 %v390, %v406
      %v423 = vsub.f32 %v391, %v407
      %v424 = vsub.f32 %v392, %v408
      %v425 = vsub.f32 %v393, %v409
      %v426 = vsub.f32 %v394, %v410
      %v427 = vsub.f32 %v395, %v411
      %v428 = vsub.f32 %v396, %v412
      %v429 = vsub.f32 %v397, %v413
      %v430 = vsub.f32 %v398, %v414
      %v431 = vmax.f32 %v415, 0.0
      %v432 = vmax.f32 %v416, 0.0
      %v433 = vmax.f32 %v417, 0.0
      %v434 = vmax.f32 %v418, 0.0
      %v435 = vmax.f32 %v419, 0.0
      %v436 = vmax.f32 %v420, 0.0
      %v437 = vmax.f32 %v421, 0.0
      %v438 = vmax.f32 %v422, 0.0
      %v439 = vmax.f32 %v423, 0.0
      %v440 = vmax.f32 %v424, 0.0
      %v441 = vmax.f32 %v425, 0.0
      %v442 = vmax.f32 %v426, 0.0
      %v443 = vmax.f32 %v427, 0.0
      %v444 = vmax.f32 %v428, 0.0
      %v445 = vmax.f32 %v429, 0.0
      %v446 = vmax.f32 %v430, 0.0
      %v447 = vadd.f32 %v431, 1e-05
      %v448 = vadd.f32 %v432, 1e-05
      %v449 = vadd.f32 %v433, 1e-05
      %v450 = vadd.f32 %v434, 1e-05
      %v451 = vadd.f32 %v435, 1e-05
      %v452 = vadd.f32 %v436, 1e-05
      %v453 = vadd.f32 %v437, 1e-05
      %v454 = vadd.f32 %v438, 1e-05
      %v455 = vadd.f32 %v439, 1e-05
      %v456 = vadd.f32 %v440, 1e-05
      %v457 = vadd.f32 %v441, 1e-05
      %v458 = vadd.f32 %v442, 1e-05
      %v459 = vadd.f32 %v443, 1e-05
      %v460 = vadd.f32 %v444, 1e-05
      %v461 = vadd.f32 %v445, 1e-05
      %v462 = vadd.f32 %v446, 1e-05
      %v463 = vrsqrt.pop %v447
      %v464 = vmul.f32 %v463, %v447
      %v465 = vmul.f32 %v464, %v463
      %v466 = vmul.f32 0.5, %v465
      %v467 = vsub.f32 1.5, %v466
      %v468 = vmul.f32 %v463, %v467
      %vm469 = vweird.f32 %v447
      %vm470 = vweird.f32 %v463
      %vm471 = vmor %vm469, %vm470
      %v472 = vsel %vm471, %v463, %v468
      %v473 = vrsqrt.pop %v448
      %v474 = vmul.f32 %v473, %v448
      %v475 = vmul.f32 %v474, %v473
      %v476 = vmul.f32 0.5, %v475
      %v477 = vsub.f32 1.5, %v476
      %v478 = vmul.f32 %v473, %v477
      %vm479 = vweird.f32 %v448
      %vm480 = vweird.f32 %v473
      %vm481 = vmor %vm479, %vm480
      %v482 = vsel %vm481, %v473, %v478
      %v483 = vrsqrt.pop %v449
      %v484 = vmul.f32 %v483, %v449
      %v485 = vmul.f32 %v484, %v483
      %v486 = vmul.f32 0.5, %v485
      %v487 = vsub.f32 1.5, %v486
      %v488 = vmul.f32 %v483, %v487
      %vm489 = vweird.f32 %v449
      %vm490 = vweird.f32 %v483
      %vm491 = vmor %vm489, %vm490
      %v492 = vsel %vm491, %v483, %v488
      %v493 = vrsqrt.pop %v450
      %v494 = vmul.f32 %v493, %v450
      %v495 = vmul.f32 %v494, %v493
      %v496 = vmul.f32 0.5, %v495
      %v497 = vsub.f32 1.5, %v496
      %v498 = vmul.f32 %v493, %v497
      %vm499 = vweird.f32 %v450
      %vm500 = vweird.f32 %v493
      %vm501 = vmor %vm499, %vm500
      %v502 = vsel %vm501, %v493, %v498
      %v503 = vrsqrt.pop %v451
      %v504 = vmul.f32 %v503, %v451
      %v505 = vmul.f32 %v504, %v503
      %v506 = vmul.f32 0.5, %v505
      %v507 = vsub.f32 1.5, %v506
      %v508 = vmul.f32 %v503, %v507
      %vm509 = vweird.f32 %v451
      %vm510 = vweird.f32 %v503
      %vm511 = vmor %vm509, %vm510
      %v512 = vsel %vm511, %v503, %v508
      %v513 = vrsqrt.pop %v452
      %v514 = vmul.f32 %v513, %v452
      %v515 = vmul.f32 %v514, %v513
      %v516 = vmul.f32 0.5, %v515
      %v517 = vsub.f32 1.5, %v516
      %v518 = vmul.f32 %v513, %v517
      %vm519 = vweird.f32 %v452
      %vm520 = vweird.f32 %v513
      %vm521 = vmor %vm519, %vm520
      %v522 = vsel %vm521, %v513, %v518
      %v523 = vrsqrt.pop %v453
      %v524 = vmul.f32 %v523, %v453
      %v525 = vmul.f32 %v524, %v523
      %v526 = vmul.f32 0.5, %v525
      %v527 = vsub.f32 1.5, %v526
      %v528 = vmul.f32 %v523, %v527
      %vm529 = vweird.f32 %v453
      %vm530 = vweird.f32 %v523
      %vm531 = vmor %vm529, %vm530
      %v532 = vsel %vm531, %v523, %v528
      %v533 = vrsqrt.pop %v454
      %v534 = vmul.f32 %v533, %v454
      %v535 = vmul.f32 %v534, %v533
      %v536 = vmul.f32 0.5, %v535
      %v537 = vsub.f32 1.5, %v536
      %v538 = vmul.f32 %v533, %v537
      %vm539 = vweird.f32 %v454
      %vm540 = vweird.f32 %v533
      %vm541 = vmor %vm539, %vm540
      %v542 = vsel %vm541, %v533, %v538
      %v543 = vrsqrt.pop %v455
      %v544 = vmul.f32 %v543, %v455
      %v545 = vmul.f32 %v544, %v543
      %v546 = vmul.f32 0.5, %v545
      %v547 = vsub.f32 1.5, %v546
      %v548 = vmul.f32 %v543, %v547
      %vm549 = vweird.f32 %v455
      %vm550 = vweird.f32 %v543
      %vm551 = vmor %vm549, %vm550
      %v552 = vsel %vm551, %v543, %v548
      %v553 = vrsqrt.pop %v456
      %v554 = vmul.f32 %v553, %v456
      %v555 = vmul.f32 %v554, %v553
      %v556 = vmul.f32 0.5, %v555
      %v557 = vsub.f32 1.5, %v556
      %v558 = vmul.f32 %v553, %v557
      %vm559 = vweird.f32 %v456
      %vm560 = vweird.f32 %v553
      %vm561 = vmor %vm559, %vm560
      %v562 = vsel %vm561, %v553, %v558
      %v563 = vrsqrt.pop %v457
      %v564 = vmul.f32 %v563, %v457
      %v565 = vmul.f32 %v564, %v563
      %v566 = vmul.f32 0.5, %v565
      %v567 = vsub.f32 1.5, %v566
      %v568 = vmul.f32 %v563, %v567
      %vm569 = vweird.f32 %v457
      %vm570 = vweird.f32 %v563
      %vm571 = vmor %vm569, %vm570
      %v572 = vsel %vm571, %v563, %v568
      %v573 = vrsqrt.pop %v458
      %v574 = vmul.f32 %v573, %v458
      %v575 = vmul.f32 %v574, %v573
      %v576 = vmul.f32 0.5, %v575
      %v577 = vsub.f32 1.5, %v576
      %v578 = vmul.f32 %v573, %v577
      %vm579 = vweird.f32 %v458
      %vm580 = vweird.f32 %v573
      %vm581 = vmor %vm579, %vm580
      %v582 = vsel %vm581, %v573, %v578
      %v583 = vrsqrt.pop %v459
      %v584 = vmul.f32 %v583, %v459
      %v585 = vmul.f32 %v584, %v583
      %v586 = vmul.f32 0.5, %v585
      %v587 = vsub.f32 1.5, %v586
      %v588 = vmul.f32 %v583, %v587
      %vm589 = vweird.f32 %v459
      %vm590 = vweird.f32 %v583
      %vm591 = vmor %vm589, %vm590
      %v592 = vsel %vm591, %v583, %v588
      %v593 = vrsqrt.pop %v460
      %v594 = vmul.f32 %v593, %v460
      %v595 = vmul.f32 %v594, %v593
      %v596 = vmul.f32 0.5, %v595
      %v597 = vsub.f32 1.5, %v596
      %v598 = vmul.f32 %v593, %v597
      %vm599 = vweird.f32 %v460
      %vm600 = vweird.f32 %v593
      %vm601 = vmor %vm599, %vm600
      %v602 = vsel %vm601, %v593, %v598
      %v603 = vrsqrt.pop %v461
      %v604 = vmul.f32 %v603, %v461
      %v605 = vmul.f32 %v604, %v603
      %v606 = vmul.f32 0.5, %v605
      %v607 = vsub.f32 1.5, %v606
      %v608 = vmul.f32 %v603, %v607
      %vm609 = vweird.f32 %v461
      %vm610 = vweird.f32 %v603
      %vm611 = vmor %vm609, %vm610
      %v612 = vsel %vm611, %v603, %v608
      %v613 = vrsqrt.pop %v462
      %v614 = vmul.f32 %v613, %v462
      %v615 = vmul.f32 %v614, %v613
      %v616 = vmul.f32 0.5, %v615
      %v617 = vsub.f32 1.5, %v616
      %v618 = vmul.f32 %v613, %v617
      %vm619 = vweird.f32 %v462
      %vm620 = vweird.f32 %v613
      %vm621 = vmor %vm619, %vm620
      %v622 = vsel %vm621, %v613, %v618
      %v623 = vld [vmem:[%s165] sm:$0xff]
      %v624 = vld [vmem:[%s165 + $0x8] sm:$0xff]
      %v625 = vld [vmem:[%s165 + $0x10] sm:$0xff]
      %v626 = vld [vmem:[%s165 + $0x18] sm:$0xff]
      %v627 = vld [vmem:[%s165 + $0x20] sm:$0xff]
      %v628 = vld [vmem:[%s165 + $0x28] sm:$0xff]
      %v629 = vld [vmem:[%s165 + $0x30] sm:$0xff]
      %v630 = vld [vmem:[%s165 + $0x38] sm:$0xff]
      %v631 = vld [vmem:[%s165 + $0x40] sm:$0xff]
      %v632 = vld [vmem:[%s165 + $0x48] sm:$0xff]
      %v633 = vld [vmem:[%s165 + $0x50] sm:$0xff]
      %v634 = vld [vmem:[%s165 + $0x58] sm:$0xff]
      %v635 = vld [vmem:[%s165 + $0x60] sm:$0xff]
      %v636 = vld [vmem:[%s165 + $0x68] sm:$0xff]
      %v637 = vld [vmem:[%s165 + $0x70] sm:$0xff]
      %v638 = vld [vmem:[%s165 + $0x78] sm:$0xff]
      %v639 = vmul.f32 %v472, %v623
      %v640 = vmul.f32 %v482, %v624
      %v641 = vmul.f32 %v492, %v625
      %v642 = vmul.f32 %v502, %v626
      %v643 = vmul.f32 %v512, %v627
      %v644 = vmul.f32 %v522, %v628
      %v645 = vmul.f32 %v532, %v629
      %v646 = vmul.f32 %v542, %v630
      %v647 = vmul.f32 %v552, %v631
      %v648 = vmul.f32 %v562, %v632
      %v649 = vmul.f32 %v572, %v633
      %v650 = vmul.f32 %v582, %v634
      %v651 = vmul.f32 %v592, %v635
      %v652 = vmul.f32 %v602, %v636
      %v653 = vmul.f32 %v612, %v637
      %v654 = vmul.f32 %v622, %v638
      %v655 = vmul.f32 %v367, %v639
      %v656 = vmul.f32 %v368, %v640
      %v657 = vmul.f32 %v369, %v641
      %v658 = vmul.f32 %v370, %v642
      %v659 = vmul.f32 %v371, %v643
      %v660 = vmul.f32 %v372, %v644
      %v661 = vmul.f32 %v373, %v645
      %v662 = vmul.f32 %v374, %v646
      %v663 = vmul.f32 %v375, %v647
      %v664 = vmul.f32 %v376, %v648
      %v665 = vmul.f32 %v377, %v649
      %v666 = vmul.f32 %v378, %v650
      %v667 = vmul.f32 %v379, %v651
      %v668 = vmul.f32 %v380, %v652
      %v669 = vmul.f32 %v381, %v653
      %v670 = vmul.f32 %v382, %v654
      %687 = vrot.lane.b32.xlu0 %v655, 1
      %v688 = vpop.permute.xlu0 %687
      %689 = vrot.lane.b32.xlu0 %v656, 1
      %v690 = vpop.permute.xlu0 %689
      %691 = vrot.lane.b32.xlu0 %v657, 1
      %v692 = vpop.permute.xlu0 %691
      %693 = vrot.lane.b32.xlu0 %v658, 1
      %v694 = vpop.permute.xlu0 %693
      %695 = vrot.lane.b32.xlu0 %v659, 1
      %v696 = vpop.permute.xlu0 %695
      %697 = vrot.lane.b32.xlu0 %v660, 1
      %v698 = vpop.permute.xlu0 %697
      %699 = vrot.lane.b32.xlu0 %v661, 1
      %v700 = vpop.permute.xlu0 %699
      %701 = vrot.lane.b32.xlu0 %v662, 1
      %v702 = vpop.permute.xlu0 %701
      %703 = vrot.lane.b32.xlu0 %v663, 1
      %v704 = vpop.permute.xlu0 %703
      %705 = vrot.lane.b32.xlu0 %v664, 1
      %v706 = vpop.permute.xlu0 %705
      %707 = vrot.lane.b32.xlu0 %v665, 1
      %v708 = vpop.permute.xlu0 %707
      %709 = vrot.lane.b32.xlu0 %v666, 1
      %v710 = vpop.permute.xlu0 %709
      %711 = vrot.lane.b32.xlu0 %v667, 1
      %v712 = vpop.permute.xlu0 %711
      %713 = vrot.lane.b32.xlu0 %v668, 1
      %v714 = vpop.permute.xlu0 %713
      %715 = vrot.lane.b32.xlu0 %v669, 1
      %v716 = vpop.permute.xlu0 %715
      %717 = vrot.lane.b32.xlu0 %v670, 1
      %v718 = vpop.permute.xlu0 %717
      %v735 = vsub.f32 %v623, %v688
      %v736 = vsub.f32 %v624, %v690
      %v737 = vsub.f32 %v625, %v692
      %v738 = vsub.f32 %v626, %v694
      %v739 = vsub.f32 %v627, %v696
      %v740 = vsub.f32 %v628, %v698
      %v741 = vsub.f32 %v629, %v700
      %v742 = vsub.f32 %v630, %v702
      %v743 = vsub.f32 %v631, %v704
      %v744 = vsub.f32 %v632, %v706
      %v745 = vsub.f32 %v633, %v708
      %v746 = vsub.f32 %v634, %v710
      %v747 = vsub.f32 %v635, %v712
      %v748 = vsub.f32 %v636, %v714
      %v749 = vsub.f32 %v637, %v716
      %v750 = vsub.f32 %v638, %v718
      %752 = vset.pattern.permute.xlu0 0
      %753 = vperm.xlu0 %752, %v639
      %v754 = vpop.permute.xlu0 %753
      %757 = vset.pattern.permute.xlu0 0
      %758 = vperm.xlu0 %757, %v640
      %v759 = vpop.permute.xlu0 %758
      %762 = vset.pattern.permute.xlu0 0
      %763 = vperm.xlu0 %762, %v641
      %v764 = vpop.permute.xlu0 %763
      %767 = vset.pattern.permute.xlu0 0
      %768 = vperm.xlu0 %767, %v642
      %v769 = vpop.permute.xlu0 %768
      %772 = vset.pattern.permute.xlu0 0
      %773 = vperm.xlu0 %772, %v643
      %v774 = vpop.permute.xlu0 %773
      %777 = vset.pattern.permute.xlu0 0
      %778 = vperm.xlu0 %777, %v644
      %v779 = vpop.permute.xlu0 %778
      %782 = vset.pattern.permute.xlu0 0
      %783 = vperm.xlu0 %782, %v645
      %v784 = vpop.permute.xlu0 %783
      %787 = vset.pattern.permute.xlu0 0
      %788 = vperm.xlu0 %787, %v646
      %v789 = vpop.permute.xlu0 %788
      %792 = vset.pattern.permute.xlu0 0
      %793 = vperm.xlu0 %792, %v647
      %v794 = vpop.permute.xlu0 %793
      %797 = vset.pattern.permute.xlu0 0
      %798 = vperm.xlu0 %797, %v648
      %v799 = vpop.permute.xlu0 %798
      %802 = vset.pattern.permute.xlu0 0
      %803 = vperm.xlu0 %802, %v649
      %v804 = vpop.permute.xlu0 %803
      %807 = vset.pattern.permute.xlu0 0
      %808 = vperm.xlu0 %807, %v650
      %v809 = vpop.permute.xlu0 %808
      %812 = vset.pattern.permute.xlu0 0
      %813 = vperm.xlu0 %812, %v651
      %v814 = vpop.permute.xlu0 %813
      %817 = vset.pattern.permute.xlu0 0
      %818 = vperm.xlu0 %817, %v652
      %v819 = vpop.permute.xlu0 %818
      %822 = vset.pattern.permute.xlu0 0
      %823 = vperm.xlu0 %822, %v653
      %v824 = vpop.permute.xlu0 %823
      %827 = vset.pattern.permute.xlu0 0
      %828 = vperm.xlu0 %827, %v654
      %v829 = vpop.permute.xlu0 %828
      %v831 = vmul.f32 %v174, %v754
      %v832 = vmul.f32 %v175, %v754
      %v833 = vmul.f32 %v176, %v759
      %v834 = vmul.f32 %v177, %v759
      %v835 = vmul.f32 %v178, %v764
      %v836 = vmul.f32 %v179, %v764
      %v837 = vmul.f32 %v180, %v769
      %v838 = vmul.f32 %v181, %v769
      %v839 = vmul.f32 %v182, %v774
      %v840 = vmul.f32 %v183, %v774
      %v841 = vmul.f32 %v184, %v779
      %v842 = vmul.f32 %v185, %v779
      %v843 = vmul.f32 %v186, %v784
      %v844 = vmul.f32 %v187, %v784
      %v845 = vmul.f32 %v188, %v789
      %v846 = vmul.f32 %v189, %v789
      %v847 = vmul.f32 %v190, %v794
      %v848 = vmul.f32 %v191, %v794
      %v849 = vmul.f32 %v192, %v799
      %v850 = vmul.f32 %v193, %v799
      %v851 = vmul.f32 %v194, %v804
      %v852 = vmul.f32 %v195, %v804
      %v853 = vmul.f32 %v196, %v809
      %v854 = vmul.f32 %v197, %v809
      %v855 = vmul.f32 %v198, %v814
      %v856 = vmul.f32 %v199, %v814
      %v857 = vmul.f32 %v200, %v819
      %v858 = vmul.f32 %v201, %v819
      %v859 = vmul.f32 %v202, %v824
      %v860 = vmul.f32 %v203, %v824
      %v861 = vmul.f32 %v204, %v829
      %v862 = vmul.f32 %v205, %v829
      %864 = vset.pattern.permute.xlu0 1
      %865 = vperm.xlu0 %864, %v735
      %v866 = vpop.permute.xlu0 %865
      %869 = vset.pattern.permute.xlu0 1
      %870 = vperm.xlu0 %869, %v736
      %v871 = vpop.permute.xlu0 %870
      %874 = vset.pattern.permute.xlu0 1
      %875 = vperm.xlu0 %874, %v737
      %v876 = vpop.permute.xlu0 %875
      %879 = vset.pattern.permute.xlu0 1
      %880 = vperm.xlu0 %879, %v738
      %v881 = vpop.permute.xlu0 %880
      %884 = vset.pattern.permute.xlu0 1
      %885 = vperm.xlu0 %884, %v739
      %v886 = vpop.permute.xlu0 %885
      %889 = vset.pattern.permute.xlu0 1
      %890 = vperm.xlu0 %889, %v740
      %v891 = vpop.permute.xlu0 %890
      %894 = vset.pattern.permute.xlu0 1
      %895 = vperm.xlu0 %894, %v741
      %v896 = vpop.permute.xlu0 %895
      %899 = vset.pattern.permute.xlu0 1
      %900 = vperm.xlu0 %899, %v742
      %v901 = vpop.permute.xlu0 %900
      %904 = vset.pattern.permute.xlu0 1
      %905 = vperm.xlu0 %904, %v743
      %v906 = vpop.permute.xlu0 %905
      %909 = vset.pattern.permute.xlu0 1
      %910 = vperm.xlu0 %909, %v744
      %v911 = vpop.permute.xlu0 %910
      %914 = vset.pattern.permute.xlu0 1
      %915 = vperm.xlu0 %914, %v745
      %v916 = vpop.permute.xlu0 %915
      %919 = vset.pattern.permute.xlu0 1
      %920 = vperm.xlu0 %919, %v746
      %v921 = vpop.permute.xlu0 %920
      %924 = vset.pattern.permute.xlu0 1
      %925 = vperm.xlu0 %924, %v747
      %v926 = vpop.permute.xlu0 %925
      %929 = vset.pattern.permute.xlu0 1
      %930 = vperm.xlu0 %929, %v748
      %v931 = vpop.permute.xlu0 %930
      %934 = vset.pattern.permute.xlu0 1
      %935 = vperm.xlu0 %934, %v749
      %v936 = vpop.permute.xlu0 %935
      %939 = vset.pattern.permute.xlu0 1
      %940 = vperm.xlu0 %939, %v750
      %v941 = vpop.permute.xlu0 %940
      %v943 = vadd.f32 %v831, %v866
      %v944 = vadd.f32 %v832, %v866
      %v945 = vadd.f32 %v833, %v871
      %v946 = vadd.f32 %v834, %v871
      %v947 = vadd.f32 %v835, %v876
      %v948 = vadd.f32 %v836, %v876
      %v949 = vadd.f32 %v837, %v881
      %v950 = vadd.f32 %v838, %v881
      %v951 = vadd.f32 %v839, %v886
      %v952 = vadd.f32 %v840, %v886
      %v953 = vadd.f32 %v841, %v891
      %v954 = vadd.f32 %v842, %v891
      %v955 = vadd.f32 %v843, %v896
      %v956 = vadd.f32 %v844, %v896
      %v957 = vadd.f32 %v845, %v901
      %v958 = vadd.f32 %v846, %v901
      %v959 = vadd.f32 %v847, %v906
      %v960 = vadd.f32 %v848, %v906
      %v961 = vadd.f32 %v849, %v911
      %v962 = vadd.f32 %v850, %v911
      %v963 = vadd.f32 %v851, %v916
      %v964 = vadd.f32 %v852, %v916
      %v965 = vadd.f32 %v853, %v921
      %v966 = vadd.f32 %v854, %v921
      %v967 = vadd.f32 %v855, %v926
      %v968 = vadd.f32 %v856, %v926
      %v969 = vadd.f32 %v857, %v931
      %v970 = vadd.f32 %v858, %v931
      %v971 = vadd.f32 %v859, %v936
      %v972 = vadd.f32 %v860, %v936
      %v973 = vadd.f32 %v861, %v941
      %v974 = vadd.f32 %v862, %v941
      %v975 = vmax.f32 %v943, 0.0
      %v976 = vmax.f32 %v944, 0.0
      %v977 = vmax.f32 %v945, 0.0
      %v978 = vmax.f32 %v946, 0.0
      %v979 = vmax.f32 %v947, 0.0
      %v980 = vmax.f32 %v948, 0.0
      %v981 = vmax.f32 %v949, 0.0
      %v982 = vmax.f32 %v950, 0.0
      %v983 = vmax.f32 %v951, 0.0
      %v984 = vmax.f32 %v952, 0.0
      %v985 = vmax.f32 %v953, 0.0
      %v986 = vmax.f32 %v954, 0.0
      %v987 = vmax.f32 %v955, 0.0
      %v988 = vmax.f32 %v956, 0.0
      %v989 = vmax.f32 %v957, 0.0
      %v990 = vmax.f32 %v958, 0.0
      %v991 = vmax.f32 %v959, 0.0
      %v992 = vmax.f32 %v960, 0.0
      %v993 = vmax.f32 %v961, 0.0
      %v994 = vmax.f32 %v962, 0.0
      %v995 = vmax.f32 %v963, 0.0
      %v996 = vmax.f32 %v964, 0.0
      %v997 = vmax.f32 %v965, 0.0
      %v998 = vmax.f32 %v966, 0.0
      %v999 = vmax.f32 %v967, 0.0
      %v1000 = vmax.f32 %v968, 0.0
      %v1001 = vmax.f32 %v969, 0.0
      %v1002 = vmax.f32 %v970, 0.0
      %v1003 = vmax.f32 %v971, 0.0
      %v1004 = vmax.f32 %v972, 0.0
      %v1005 = vmax.f32 %v973, 0.0
      %v1006 = vmax.f32 %v974, 0.0
      %1007 = vst [vmem:[%s172] sm:$0xff] %v975
      %1008 = vst.msk [vmem:[%s172 + $0x8] sm:$0xff] %vm206, %v976
      %1009 = vst [vmem:[%s172 + $0x10] sm:$0xff] %v977
      %1010 = vst.msk [vmem:[%s172 + $0x18] sm:$0xff] %vm206, %v978
      %1011 = vst [vmem:[%s172 + $0x20] sm:$0xff] %v979
      %1012 = vst.msk [vmem:[%s172 + $0x28] sm:$0xff] %vm206, %v980
      %1013 = vst [vmem:[%s172 + $0x30] sm:$0xff] %v981
      %1014 = vst.msk [vmem:[%s172 + $0x38] sm:$0xff] %vm206, %v982
      %1015 = vst [vmem:[%s172 + $0x40] sm:$0xff] %v983
      %1016 = vst.msk [vmem:[%s172 + $0x48] sm:$0xff] %vm206, %v984
      %1017 = vst [vmem:[%s172 + $0x50] sm:$0xff] %v985
      %1018 = vst.msk [vmem:[%s172 + $0x58] sm:$0xff] %vm206, %v986
      %1019 = vst [vmem:[%s172 + $0x60] sm:$0xff] %v987
      %1020 = vst.msk [vmem:[%s172 + $0x68] sm:$0xff] %vm206, %v988
      %1021 = vst [vmem:[%s172 + $0x70] sm:$0xff] %v989
      %1022 = vst.msk [vmem:[%s172 + $0x78] sm:$0xff] %vm206, %v990
      %1023 = vst [vmem:[%s172 + $0x80] sm:$0xff] %v991
      %1024 = vst.msk [vmem:[%s172 + $0x88] sm:$0xff] %vm206, %v992
      %1025 = vst [vmem:[%s172 + $0x90] sm:$0xff] %v993
      %1026 = vst.msk [vmem:[%s172 + $0x98] sm:$0xff] %vm206, %v994
      %1027 = vst [vmem:[%s172 + $0xa0] sm:$0xff] %v995
      %1028 = vst.msk [vmem:[%s172 + $0xa8] sm:$0xff] %vm206, %v996
      %1029 = vst [vmem:[%s172 + $0xb0] sm:$0xff] %v997
      %1030 = vst.msk [vmem:[%s172 + $0xb8] sm:$0xff] %vm206, %v998
      %1031 = vst [vmem:[%s172 + $0xc0] sm:$0xff] %v999
      %1032 = vst.msk [vmem:[%s172 + $0xc8] sm:$0xff] %vm206, %v1000
      %1033 = vst [vmem:[%s172 + $0xd0] sm:$0xff] %v1001
      %1034 = vst.msk [vmem:[%s172 + $0xd8] sm:$0xff] %vm206, %v1002
      %1035 = vst [vmem:[%s172 + $0xe0] sm:$0xff] %v1003
      %1036 = vst.msk [vmem:[%s172 + $0xe8] sm:$0xff] %vm206, %v1004
      %1037 = vst [vmem:[%s172 + $0xf0] sm:$0xff] %v1005
      %1038 = vst.msk [vmem:[%s172 + $0xf8] sm:$0xff] %vm206, %v1006
      %s1039 = smul.u32 16, %s13
      %p1040 = scmp.lt.s32.totalorder %s1039, 95
      %s1041 = scalar_select %p1040, %s1039, 95
      %s1042 = smul.addr %s1041, 2
      %s1043 = smul.addr %s1042, 8
      %s1044 = scalar_lea.vmem %s2, %s1043
      // Predicated region
      $region29: #{tpu_custom_call.1} parent=27 // pred_check
        %p1045 = pneg %p83
      $region30: #{tpu_custom_call.1} parent=27 // pred_check_branch
        %1047 = sbr.rel (%p1045) target = $region32
      $region31: #{tpu_custom_call.1} parent=27 // pred_region
        %s1048 = smul.u32 16, %s13
      $region32: #{tpu_custom_call.1} parent=27 // pred_fallthru
        _
    $region28: #{tpu_custom_call.1} parent=5 // pred_fallthru
      _
    %p1049 = scmp.le.s32.totalorder 2, %s8
    // Predicated region
    $region33: #{tpu_custom_call.1} parent=5 // pred_check
      %p1050 = pneg %p1049
    $region34: #{tpu_custom_call.1} parent=5 // pred_check_branch
      %1052 = sbr.rel (%p1050) target = $region36
    $region35: #{tpu_custom_call.1} parent=5 // pred_region
      %s1053 = ssub.s32 %s8, 2
      // Predicated region
      $region37: #{tpu_custom_call.1} parent=35 // pred_check
        %p1054 = pneg %p89
      $region38: #{tpu_custom_call.1} parent=35 // pred_check_branch
        %1056 = sbr.rel (%p1054) target = $region40
      $region39: #{tpu_custom_call.1} parent=35 // pred_region
        %s1057 = smul.u32 16, %s14
        %p1058 = scmp.lt.s32.totalorder %s1057, 95
        %s1059 = scalar_select %p1058, %s1057, 95
        %s1060 = smul.addr %s1059, 2
        %s1061 = smul.addr %s1060, 8
        %s1062 = scalar_lea.vmem %s2, %s1061
      $region40: #{tpu_custom_call.1} parent=35 // pred_fallthru
        _
    $region36: #{tpu_custom_call.1} parent=5 // pred_fallthru
      _
  $region6: #{tpu_custom_call.1} parent=0 // loop_footer
    %s12 = sadd.s32 1, %s8
  $region7: #{tpu_custom_call.1} parent=0 // loop_footer_branch
    %7 = sbr.rel target = $region3
  $region8: #{tpu_custom_call.1} parent=0 // loop_exit
    _

</llo_original>
